<compile_context>
chip_gen: v7x
topology: tpu7x:2x2x1
jax: 0.10.0
libtpu: 0.0.40
codegen_flags: <defaults>
</compile_context>

<pallas_src>
import functools

import jax
import jax.numpy as jnp
from jax.experimental import pallas as pl
from jax.experimental.pallas import tpu as pltpu


def _channel_attention_kernel(x_ref, w1_ref, b1_ref, w2_ref, b2_ref, o_ref, *, hw):
    bt, c, hwp = x_ref.shape
    x = x_ref[...]                               # (Bt, C, HWp)
    xf = x.astype(jnp.float32)

    # --- global avg / max pooling over the spatial lanes (masked if padded) ---
    if hw == hwp:
        ssum = jnp.sum(xf, axis=-1)              # (Bt, C)
        smax = jnp.max(xf, axis=-1)              # (Bt, C)
    else:
        lane = jax.lax.broadcasted_iota(jnp.int32, (bt, c, hwp), 2)
        valid = lane < hw
        ssum = jnp.sum(jnp.where(valid, xf, 0.0), axis=-1)
        smax = jnp.max(jnp.where(valid, xf, -jnp.inf), axis=-1)
    avg = ssum * (1.0 / hw)                      # (Bt, C)

    # --- shared MLP, avg & max fused into one pass; no MXU (VPU mul + XLU lane reduce) ---
    pooled = jnp.concatenate([avg, smax], axis=0)              # (2*Bt, C) lane-dense
    w1 = w1_ref[...]                                           # (hidden, C)
    b1 = b1_ref[...]                                           # (1, hidden)
    w2 = w2_ref[...]                                           # (C, hidden)
    b2 = b2_ref[...]                                           # (1, C)

    # layer 1: h[p, j] = sum_c pooled[p, c] * w1[j, c] + b1[j]   (lane reduce over C)
    h = jnp.sum(pooled[:, None, :] * w1[None, :, :], axis=-1) + b1   # (2*Bt, hidden)
    h = jnp.maximum(h, 0.0)                                          # ReLU
    # layer 2: out[p, c] = sum_j h[p, j] * w2[c, j] + b2[c]      (lane reduce over hidden)
    fc_out = jnp.sum(h[:, None, :] * w2[None, :, :], axis=-1) + b2   # (2*Bt, C)

    # sigmoid(fc(avg) + fc(max))  (b2 correctly appears twice, matching the reference)
    y = jax.nn.sigmoid(fc_out[:bt] + fc_out[bt:])                    # (Bt, C)

    # --- scale x by the per-channel gate and write back ---
    o_ref[...] = (xf * y[:, :, None]).astype(o_ref.dtype)


def channel_attention(x_nchw, w1, b1, w2, b2, *, target_tile_bytes=2 * 1024 * 1024):
    """Pallas TPU forward of ChannelAttention.

    x_nchw: (B, C, H, W).  PyTorch nn.Linear layouts:
      w1: (hidden, C), b1: (hidden,), w2: (C, hidden), b2: (C,).
    """
    B, C, H, W = x_nchw.shape
    hidden = w1.shape[0]
    HW = H * W
    HWp = ((HW + 127) // 128) * 128              # lane-align the spatial axis
    itemsize = jnp.dtype(x_nchw.dtype).itemsize
    w_itemsize = jnp.dtype(w1.dtype).itemsize

    x_flat = x_nchw.reshape(B, C, HW)
    if HWp != HW:
        x_flat = jnp.pad(x_flat, ((0, 0), (0, 0), (0, HWp - HW)))

    # --- how many images per block: ~1-4 MiB tiles, but keep >= 4 grid steps
    # when the batch allows (megacore sharding on v7x + pipeline depth). ---
    per_image_bytes = C * HWp * itemsize
    bt_bytes = max(1, target_tile_bytes // per_image_bytes)
    bt_grid = max(1, B // 4)
    bt_target = int(max(1, min(B, bt_bytes, bt_grid)))
    Bt = max(d for d in range(1, bt_target + 1) if B % d == 0)
    grid = (B // Bt,)

    tile_bytes = Bt * per_image_bytes
    weight_bytes = int(w1.size + w2.size + b1.size + b2.size) * w_itemsize
    # input + output double-buffered tiles, weights, slack for small intermediates.
    vmem_needed = 4 * tile_bytes + 2 * weight_bytes + (2 << 20)
    # TODO(synk): for very large single-image slabs (C*HW*4 >~ 8 MiB) on v7x (64 MiB
    # VMEM), split HW into a second grid axis (two-pass: pooled stats, then scale)
    # instead of raising the VMEM limit.

    cost = pl.CostEstimate(
        flops=2 * B * C * HWp + 8 * B * C * hidden,
        transcendentals=B * C,
        bytes_accessed=2 * B * C * HWp * itemsize + weight_bytes,
    )

    kernel = functools.partial(_channel_attention_kernel, hw=HW)

    out_flat = pl.pallas_call(
        kernel,
        out_shape=jax.ShapeDtypeStruct((B, C, HWp), x_nchw.dtype),
        grid_spec=pltpu.PrefetchScalarGridSpec(
            num_scalar_prefetch=0,
            grid=grid,
            in_specs=[
                pl.BlockSpec((Bt, C, HWp), lambda b: (b, 0, 0)),
                pl.BlockSpec((hidden, C), lambda b: (0, 0)),
                pl.BlockSpec((1, hidden), lambda b: (0, 0)),
                pl.BlockSpec((C, hidden), lambda b: (0, 0)),
                pl.BlockSpec((1, C), lambda b: (0, 0)),
            ],
            out_specs=pl.BlockSpec((Bt, C, HWp), lambda b: (b, 0, 0)),
        ),
        compiler_params=pltpu.CompilerParams(
            dimension_semantics=("parallel",),
            vmem_limit_bytes=int(max(32 * 1024 * 1024, vmem_needed)),
        ),
        cost_estimate=cost,
    )(x_flat, w1, b1.reshape(1, hidden), w2, b2.reshape(1, C))

    if HWp != HW:
        out_flat = out_flat[:, :, :HW]
    return out_flat.reshape(B, C, H, W)


def channel_attention_ref(x, w1, b1, w2, b2):
    """Pure-JAX reference matching the PyTorch forward."""
    x1 = jnp.mean(x, axis=(2, 3))   # (B, C)
    x2 = jnp.max(x, axis=(2, 3))    # (B, C)

    def fc(v):
        h = jnp.maximum(v @ w1.T + b1, 0.0)
        return h @ w2.T + b2

    y = jax.nn.sigmoid(fc(x1) + fc(x2))
    return x * y[:, :, None, None]


def _run_case(key, B, C, H, W, reduction):
    hidden = max(1, C // reduction)
    kx, k1, k2, k3, k4 = jax.random.split(key, 5)
    x = jax.random.normal(kx, (B, C, H, W), dtype=jnp.float32)
    # PyTorch nn.Linear layout: weight (out, in), bias (out,)
    w1 = jax.random.normal(k1, (hidden, C), dtype=jnp.float32) * 0.1
    b1 = jax.random.normal(k2, (hidden,), dtype=jnp.float32) * 0.1
    w2 = jax.random.normal(k3, (C, hidden), dtype=jnp.float32) * 0.1
    b2 = jax.random.normal(k4, (C,), dtype=jnp.float32) * 0.1

    out = jax.block_until_ready(channel_attention(x, w1, b1, w2, b2))
    ref = channel_attention_ref(x, w1, b1, w2, b2)
    assert out.shape == (B, C, H, W)
    assert jnp.allclose(out, ref, atol=1e-5, rtol=1e-5), "mismatch vs reference"


if __name__ == "__main__":
    key = jax.random.PRNGKey(0)
    k_a, k_b = jax.random.split(key)

    # Main config: in_features = C = 32, reduction = 16 -> hidden = 2, HW lane-aligned.
    _run_case(k_a, B=2, C=32, H=16, W=16, reduction=16)
    # Non-lane-aligned spatial size (HW = 49 -> padded to 128, masked reductions).
    _run_case(k_b, B=3, C=16, H=7, W=7, reduction=8)

    print("KERNEL_OK")
</pallas_src>

<mosaic_0001>
module attributes {stable_mosaic.version = 11 : i64} {
  func.func @_channel_attention_kernel(%arg0: i32, %arg1: memref<1x32x256xf32, #tpu.memory_space<vmem>>, %arg2: memref<2x32xf32, #tpu.memory_space<vmem>>, %arg3: memref<1x2xf32, #tpu.memory_space<vmem>>, %arg4: memref<32x2xf32, #tpu.memory_space<vmem>>, %arg5: memref<1x32xf32, #tpu.memory_space<vmem>>, %arg6: memref<1x32x256xf32, #tpu.memory_space<vmem>>) attributes {dimension_semantics = [#tpu.dimension_semantics<parallel>], iteration_bounds = array<i64: 2>, scalar_prefetch = 0 : i64, scratch_operands = 0 : i64, tpu.core_type = #tpu.core_type<tc>, window_params = [{transform_indices = @transform_0, window_bounds = array<i64: 1, 32, 256>}, {pipeline_mode = #tpu.pipeline_mode<synchronous>, transform_indices = @transform_1, window_bounds = array<i64: 2, 32>}, {pipeline_mode = #tpu.pipeline_mode<synchronous>, transform_indices = @transform_2, window_bounds = array<i64: 1, 2>}, {pipeline_mode = #tpu.pipeline_mode<synchronous>, transform_indices = @transform_3, window_bounds = array<i64: 32, 2>}, {pipeline_mode = #tpu.pipeline_mode<synchronous>, transform_indices = @transform_4, window_bounds = array<i64: 1, 32>}, {transform_indices = @transform_5, window_bounds = array<i64: 1, 32, 256>}]} {
    %c0 = arith.constant 0 : index
    %c0_0 = arith.constant 0 : index
    %c0_1 = arith.constant 0 : index
    %0 = vector.load %arg1[%c0, %c0_0, %c0_1] : memref<1x32x256xf32, #tpu.memory_space<vmem>>, vector<1x32x256xf32>
    %cst = arith.constant dense<0.000000e+00> : vector<1x32xf32>
    %1 = vector.multi_reduction <add>, %0, %cst [2] : vector<1x32x256xf32> to vector<1x32xf32>
    %cst_2 = arith.constant dense<0xFF800000> : vector<1x32xf32>
    %2 = vector.multi_reduction <maximumf>, %0, %cst_2 [2] : vector<1x32x256xf32> to vector<1x32xf32>
    %cst_3 = arith.constant 3.906250e-03 : f32
    %3 = vector.broadcast %cst_3 : f32 to vector<1x32xf32>
    %4 = arith.mulf %1, %3 : vector<1x32xf32>
    %5 = tpu.concatenate %4, %2 in 0 : vector<1x32xf32>, vector<1x32xf32> -> vector<2x32xf32>
    %c0_4 = arith.constant 0 : index
    %c0_5 = arith.constant 0 : index
    %6 = vector.load %arg2[%c0_4, %c0_5] : memref<2x32xf32, #tpu.memory_space<vmem>>, vector<2x32xf32>
    %c0_6 = arith.constant 0 : index
    %c0_7 = arith.constant 0 : index
    %7 = vector.load %arg3[%c0_6, %c0_7] : memref<1x2xf32, #tpu.memory_space<vmem>>, vector<1x2xf32>
    %c0_8 = arith.constant 0 : index
    %c0_9 = arith.constant 0 : index
    %8 = vector.load %arg4[%c0_8, %c0_9] : memref<32x2xf32, #tpu.memory_space<vmem>>, vector<32x2xf32>
    %c0_10 = arith.constant 0 : index
    %c0_11 = arith.constant 0 : index
    %9 = vector.load %arg5[%c0_10, %c0_11] : memref<1x32xf32, #tpu.memory_space<vmem>>, vector<1x32xf32>
    %10 = vector.shape_cast %5 : vector<2x32xf32> to vector<2x1x32xf32>
    %11 = vector.shape_cast %6 : vector<2x32xf32> to vector<1x2x32xf32>
    %12 = vector.broadcast %10 : vector<2x1x32xf32> to vector<2x2x32xf32>
    %13 = vector.broadcast %11 : vector<1x2x32xf32> to vector<2x2x32xf32>
    %14 = arith.mulf %12, %13 : vector<2x2x32xf32>
    %cst_12 = arith.constant dense<0.000000e+00> : vector<2x2xf32>
    %15 = vector.multi_reduction <add>, %14, %cst_12 [2] : vector<2x2x32xf32> to vector<2x2xf32>
    %16 = vector.broadcast %7 : vector<1x2xf32> to vector<2x2xf32>
    %17 = arith.addf %15, %16 : vector<2x2xf32>
    %cst_13 = arith.constant 0.000000e+00 : f32
    %18 = vector.broadcast %cst_13 : f32 to vector<2x2xf32>
    %19 = arith.maximumf %17, %18 : vector<2x2xf32>
    %20 = vector.shape_cast %19 : vector<2x2xf32> to vector<2x1x2xf32>
    %21 = vector.shape_cast %8 : vector<32x2xf32> to vector<1x32x2xf32>
    %22 = vector.broadcast %20 : vector<2x1x2xf32> to vector<2x32x2xf32>
    %23 = vector.broadcast %21 : vector<1x32x2xf32> to vector<2x32x2xf32>
    %24 = arith.mulf %22, %23 : vector<2x32x2xf32>
    %cst_14 = arith.constant dense<0.000000e+00> : vector<2x32xf32>
    %25 = vector.multi_reduction <add>, %24, %cst_14 [2] : vector<2x32x2xf32> to vector<2x32xf32>
    %26 = vector.broadcast %9 : vector<1x32xf32> to vector<2x32xf32>
    %27 = arith.addf %25, %26 : vector<2x32xf32>
    %28 = vector.extract_strided_slice %27 {offsets = [0, 0], sizes = [1, 32], strides = [1, 1]} : vector<2x32xf32> to vector<1x32xf32>
    %29 = vector.extract_strided_slice %27 {offsets = [1, 0], sizes = [1, 32], strides = [1, 1]} : vector<2x32xf32> to vector<1x32xf32>
    %30 = arith.addf %28, %29 : vector<1x32xf32>
    %31 = arith.negf %30 : vector<1x32xf32>
    %32 = math.exp %31 : vector<1x32xf32>
    %cst_15 = arith.constant 1.000000e+00 : f32
    %33 = vector.broadcast %cst_15 : f32 to vector<1x32xf32>
    %34 = arith.addf %33, %32 : vector<1x32xf32>
    %35 = arith.divf %33, %34 : vector<1x32xf32>
    %36 = vector.shape_cast %35 : vector<1x32xf32> to vector<1x32x1xf32>
    %37 = vector.broadcast %36 : vector<1x32x1xf32> to vector<1x32x256xf32>
    %38 = arith.mulf %0, %37 : vector<1x32x256xf32>
    %c0_16 = arith.constant 0 : index
    %c0_17 = arith.constant 0 : index
    %c0_18 = arith.constant 0 : index
    %39 = vector.load %arg6[%c0_16, %c0_17, %c0_18] : memref<1x32x256xf32, #tpu.memory_space<vmem>>, vector<1x32x256xf32>
    tpu.vector_store %arg6[%c0_16, %c0_17, %c0_18], %38 {strides = array<i32>} : memref<1x32x256xf32, #tpu.memory_space<vmem>>, vector<1x32x256xf32>,
    return
  }
  func.func @transform_0(%arg0: i32) -> (i32, i32, i32) {
    %c0_i32 = arith.constant 0 : i32
    %c0_i32_0 = arith.constant 0 : i32
    %c0_i32_1 = arith.constant 0 : i32
    return %arg0, %c0_i32, %c0_i32_0 : i32, i32, i32
  }
  func.func @transform_1(%arg0: i32) -> (i32, i32) {
    %c0_i32 = arith.constant 0 : i32
    %c0_i32_0 = arith.constant 0 : i32
    %c0_i32_1 = arith.constant 0 : i32
    return %c0_i32, %c0_i32_0 : i32, i32
  }
  func.func @transform_2(%arg0: i32) -> (i32, i32) {
    %c0_i32 = arith.constant 0 : i32
    %c0_i32_0 = arith.constant 0 : i32
    %c0_i32_1 = arith.constant 0 : i32
    return %c0_i32, %c0_i32_0 : i32, i32
  }
  func.func @transform_3(%arg0: i32) -> (i32, i32) {
    %c0_i32 = arith.constant 0 : i32
    %c0_i32_0 = arith.constant 0 : i32
    %c0_i32_1 = arith.constant 0 : i32
    return %c0_i32, %c0_i32_0 : i32, i32
  }
  func.func @transform_4(%arg0: i32) -> (i32, i32) {
    %c0_i32 = arith.constant 0 : i32
    %c0_i32_0 = arith.constant 0 : i32
    %c0_i32_1 = arith.constant 0 : i32
    return %c0_i32, %c0_i32_0 : i32, i32
  }
  func.func @transform_5(%arg0: i32) -> (i32, i32, i32) {
    %c0_i32 = arith.constant 0 : i32
    %c0_i32_0 = arith.constant 0 : i32
    %c0_i32_1 = arith.constant 0 : i32
    return %arg0, %c0_i32, %c0_i32_0 : i32, i32, i32
  }
}

</mosaic_0001>

<llo_original>
// kernel: tpu_custom_call.1
$region0: #{tpu_custom_call.1}
  #allocation0 [shape = 'u32[]', space=smem, size = 0x4, offset = 0x4, fixed_abs, tag = 'smem constant byte address 0x4 - core index']
  #allocation1 [shape = 'u32[144,128]{1,0:T(1,128)}', space=vmem, size = 0x12000, scoped, tag = 'internal scratch']
  %s0 = inlined_call_operand.hbm [shape: f32[2,32,256], index: 0, kind: input, shape index: {}]
  %s1 = inlined_call_operand.vmem [shape: f32[2,32], index: 1, kind: input, shape index: {}]
  %s2 = inlined_call_operand.vmem [shape: f32[1,2], index: 2, kind: input, shape index: {}]
  %s3 = inlined_call_operand.vmem [shape: f32[32,2], index: 3, kind: input, shape index: {}]
  %s4 = inlined_call_operand.vmem [shape: f32[1,32], index: 4, kind: input, shape index: {}]
  %s5 = inlined_call_operand.hbm [shape: f32[2,32,256], index: 5, kind: output, shape index: {}]
  %s6 = sld [smem:[#allocation0]]
  $region57: #{tpu_custom_call.1} parent=0
    _
  %s8 = ssub.s32 1, %s6
  %s9 = scalar_select 0, %s8, %s6
  $region1: #{tpu_custom_call.1} parent=0
    #allocation2 [shape = 'u8[65536]{0}', space=vmem, size = 0x10000, scoped, tag = 'input window, operand 0']
    #allocation3 [shape = 's32[2]{0}', space=sflag, size = 0x8, scoped, tag = 'scoped memory for tpu_custom_call.1']
    #allocation4 [shape = 's32[2]{0}', space=sflag, size = 0x8, scoped, tag = 'scoped memory for tpu_custom_call.1']
    #allocation5 [shape = 'u8[65536]{0}', space=vmem, size = 0x10000, scoped, tag = 'output window, operand 0']
    %10 = vsyncpa [#allocation3], 0
    %s11 = scalar_lea.sflag [#allocation3], 1
    %12 = vsyncpa %s11, 0
    %13 = vsyncpa [#allocation4], 0
    %s14 = scalar_lea.sflag [#allocation4], 1
    %15 = vsyncpa %s14, 0
    loop: start=0, step=1, limit=4
    $region2: #{tpu_custom_call.1} parent=1 // loop_pre_header
      _
    $region3: #{tpu_custom_call.1} parent=1 // loop_header
      %s17 = sphi 0, %s21
      %p18 = scmp.ge.s32.totalorder %s17, 4
      %s27 = sphi 0, %s29
      %s30 = sphi 0, %s27
      %s31 = sphi 0, %s30
      %s47 = sphi 0, %s31
      %s51 = sphi 0, %s51
      %s53 = sphi 0, %s51
      %s54 = sphi 0, %s53
      %s68 = sphi 0, %s54
      %s72 = sphi 0, %s72
      %s74 = sphi 0, %s72
      %s75 = sphi 0, %s74
      %s89 = sphi 0, %s75
      %s93 = sphi 0, %s93
      %s95 = sphi 0, %s93
      %s96 = sphi 0, %s95
      %s110 = sphi 0, %s96
      %s114 = sphi 0, %s114
      %s116 = sphi 0, %s114
      %s117 = sphi 0, %s116
      %s131 = sphi 0, %s117
      %s137 = sphi 0, %s139
      %s140 = sphi 0, %s137
      %s141 = sphi 0, %s140
      %s157 = sphi 0, %s141
    $region4: #{tpu_custom_call.1} parent=1 // loop_header_branch
      %20 = sbr.rel (%p18) target = $region8
    $region5: #{tpu_custom_call.1} parent=1 // loop_body
      %s22 = ssub.s32 %s17, 1
      %s23 = ssub.s32 %s17, 2
      %s24 = sadd.s32 %s17, 1
      %s25 = ssub.s32 %s17, %s24
      %p26 = scmp.eq.s32.totalorder %s25, 0
      %s28 = sadd.s32 %s27, 1
      %s29 = scalar_select %p26, %s27, %s28
      %p32 = pneg %p26
      %p33 = scmp.eq.s32.totalorder %s17, 1
      %p34 = por %p32, %p33
      %p35 = scmp.ne.s32.totalorder %s27, %s30
      %p36 = scmp.eq.s32.totalorder %s17, 0
      %p37 = por %p35, %p36
      %p38 = scmp.ne.s32.totalorder %s27, %s30
      %p39 = scmp.eq.s32.totalorder %s22, 1
      %p40 = por %p38, %p39
      %p41 = scmp.ne.s32.totalorder %s30, %s31
      %p42 = scmp.eq.s32.totalorder %s22, 0
      %p43 = por %p41, %p42
      %p44 = scmp.ne.s32.totalorder %s30, %s31
      %p45 = scmp.eq.s32.totalorder %s23, 1
      %p46 = por %p44, %p45
      %p48 = scmp.ne.s32.totalorder %s31, %s47
      %p49 = scmp.eq.s32.totalorder %s23, 0
      %p50 = por %p48, %p49
      %s52 = sadd.s32 %s51, 1
      %p55 = scmp.eq.s32.totalorder %s17, 1
      %p56 = scmp.ne.s32.totalorder %s51, %s53
      %p57 = scmp.eq.s32.totalorder %s17, 0
      %p58 = por %p56, %p57
      %p59 = scmp.ne.s32.totalorder %s51, %s53
      %p60 = scmp.eq.s32.totalorder %s22, 1
      %p61 = por %p59, %p60
      %p62 = scmp.ne.s32.totalorder %s53, %s54
      %p63 = scmp.eq.s32.totalorder %s22, 0
      %p64 = por %p62, %p63
      %p65 = scmp.ne.s32.totalorder %s53, %s54
      %p66 = scmp.eq.s32.totalorder %s23, 1
      %p67 = por %p65, %p66
      %p69 = scmp.ne.s32.totalorder %s54, %s68
      %p70 = scmp.eq.s32.totalorder %s23, 0
      %p71 = por %p69, %p70
      %s73 = sadd.s32 %s72, 1
      %p76 = scmp.eq.s32.totalorder %s17, 1
      %p77 = scmp.ne.s32.totalorder %s72, %s74
      %p78 = scmp.eq.s32.totalorder %s17, 0
      %p79 = por %p77, %p78
      %p80 = scmp.ne.s32.totalorder %s72, %s74
      %p81 = scmp.eq.s32.totalorder %s22, 1
      %p82 = por %p80, %p81
      %p83 = scmp.ne.s32.totalorder %s74, %s75
      %p84 = scmp.eq.s32.totalorder %s22, 0
      %p85 = por %p83, %p84
      %p86 = scmp.ne.s32.totalorder %s74, %s75
      %p87 = scmp.eq.s32.totalorder %s23, 1
      %p88 = por %p86, %p87
      %p90 = scmp.ne.s32.totalorder %s75, %s89
      %p91 = scmp.eq.s32.totalorder %s23, 0
      %p92 = por %p90, %p91
      %s94 = sadd.s32 %s93, 1
      %p97 = scmp.eq.s32.totalorder %s17, 1
      %p98 = scmp.ne.s32.totalorder %s93, %s95
      %p99 = scmp.eq.s32.totalorder %s17, 0
      %p100 = por %p98, %p99
      %p101 = scmp.ne.s32.totalorder %s93, %s95
      %p102 = scmp.eq.s32.totalorder %s22, 1
      %p103 = por %p101, %p102
      %p104 = scmp.ne.s32.totalorder %s95, %s96
      %p105 = scmp.eq.s32.totalorder %s22, 0
      %p106 = por %p104, %p105
      %p107 = scmp.ne.s32.totalorder %s95, %s96
      %p108 = scmp.eq.s32.totalorder %s23, 1
      %p109 = por %p107, %p108
      %p111 = scmp.ne.s32.totalorder %s96, %s110
      %p112 = scmp.eq.s32.totalorder %s23, 0
      %p113 = por %p111, %p112
      %s115 = sadd.s32 %s114, 1
      %p118 = scmp.eq.s32.totalorder %s17, 1
      %p119 = scmp.ne.s32.totalorder %s114, %s116
      %p120 = scmp.eq.s32.totalorder %s17, 0
      %p121 = por %p119, %p120
      %p122 = scmp.ne.s32.totalorder %s114, %s116
      %p123 = scmp.eq.s32.totalorder %s22, 1
      %p124 = por %p122, %p123
      %p125 = scmp.ne.s32.totalorder %s116, %s117
      %p126 = scmp.eq.s32.totalorder %s22, 0
      %p127 = por %p125, %p126
      %p128 = scmp.ne.s32.totalorder %s116, %s117
      %p129 = scmp.eq.s32.totalorder %s23, 1
      %p130 = por %p128, %p129
      %p132 = scmp.ne.s32.totalorder %s117, %s131
      %p133 = scmp.eq.s32.totalorder %s23, 0
      %p134 = por %p132, %p133
      %s135 = ssub.s32 %s17, %s24
      %p136 = scmp.eq.s32.totalorder %s135, 0
      %s138 = sadd.s32 %s137, 1
      %s139 = scalar_select %p136, %s137, %s138
      %p142 = pneg %p136
      %p143 = scmp.eq.s32.totalorder %s17, 1
      %p144 = por %p142, %p143
      %p145 = scmp.ne.s32.totalorder %s137, %s140
      %p146 = scmp.eq.s32.totalorder %s17, 0
      %p147 = por %p145, %p146
      %p148 = scmp.ne.s32.totalorder %s137, %s140
      %p149 = scmp.eq.s32.totalorder %s22, 1
      %p150 = por %p148, %p149
      %p151 = scmp.ne.s32.totalorder %s140, %s141
      %p152 = scmp.eq.s32.totalorder %s22, 0
      %p153 = por %p151, %p152
      %p154 = scmp.ne.s32.totalorder %s140, %s141
      %p155 = scmp.eq.s32.totalorder %s23, 1
      %p156 = por %p154, %p155
      %p158 = scmp.ne.s32.totalorder %s141, %s157
      %p159 = scmp.eq.s32.totalorder %s23, 0
      %p160 = por %p158, %p159
      %p161 = scmp.le.s32.totalorder 1, %s17
      %p162 = scmp.lt.s32.totalorder %s17, 3
      %p163 = pnand %p161, %p162
      %p164 = pneg %p163
      // Predicated region
      $region9: #{tpu_custom_call.1} parent=5 // pred_check
        _
      $region10: #{tpu_custom_call.1} parent=5 // pred_check_branch
        %166 = sbr.rel (%p163) target = $region12
      $region11: #{tpu_custom_call.1} parent=5 // pred_region
        %s167 = ssub.s32 %s17, 1
        // Predicated region
        $region13: #{tpu_custom_call.1} parent=11 // pred_check
          %p168 = pneg %p64
        $region14: #{tpu_custom_call.1} parent=11 // pred_check_branch
          %170 = sbr.rel (%p168) target = $region16
        $region15: #{tpu_custom_call.1} parent=11 // pred_region
          _
        $region16: #{tpu_custom_call.1} parent=11 // pred_fallthru
          _
        // Predicated region
        $region17: #{tpu_custom_call.1} parent=11 // pred_check
          %p171 = pneg %p85
        $region18: #{tpu_custom_call.1} parent=11 // pred_check_branch
          %173 = sbr.rel (%p171) target = $region20
        $region19: #{tpu_custom_call.1} parent=11 // pred_region
          _
        $region20: #{tpu_custom_call.1} parent=11 // pred_fallthru
          _
        // Predicated region
        $region21: #{tpu_custom_call.1} parent=11 // pred_check
          %p174 = pneg %p106
        $region22: #{tpu_custom_call.1} parent=11 // pred_check_branch
          %176 = sbr.rel (%p174) target = $region24
        $region23: #{tpu_custom_call.1} parent=11 // pred_region
          _
        $region24: #{tpu_custom_call.1} parent=11 // pred_fallthru
          _
        // Predicated region
        $region25: #{tpu_custom_call.1} parent=11 // pred_check
          %p177 = pneg %p127
        $region26: #{tpu_custom_call.1} parent=11 // pred_check_branch
          %179 = sbr.rel (%p177) target = $region28
        $region27: #{tpu_custom_call.1} parent=11 // pred_region
          _
        $region28: #{tpu_custom_call.1} parent=11 // pred_fallthru
          _
      $region12: #{tpu_custom_call.1} parent=5 // pred_fallthru
        _
      %p180 = scmp.lt.s32.totalorder %s17, 2
      // Predicated region
      $region29: #{tpu_custom_call.1} parent=5 // pred_check
        %p181 = pneg %p180
      $region30: #{tpu_custom_call.1} parent=5 // pred_check_branch
        %183 = sbr.rel (%p181) target = $region32
      $region31: #{tpu_custom_call.1} parent=5 // pred_region
        // Predicated region
        $region33: #{tpu_custom_call.1} parent=31 // pred_check
          %p184 = pneg %p37
        $region34: #{tpu_custom_call.1} parent=31 // pred_check_branch
          %186 = sbr.rel (%p184) target = $region36
        $region35: #{tpu_custom_call.1} parent=31 // pred_region
          %s187 = sand.u32 %s27, 1
          %s188 = scalar_lea.sflag [#allocation3], %s187
          %s189 = sand.u32 %s27, 1
          %s190 = smul.addr %s189, 64
          %s191 = scalar_lea.vmem [#allocation2], %s190
          %s193 = ssub.s32 1024, 1024
          %194 = vsyncadd %s188, %s193
          %s195 = smul.addr %s17, 8
          %s196 = smul.addr %s195, 128
          %s197 = scalar_lea.hbm %s0, %s196
          %s198 = sshll.u32 %s191, 4
          %s199 = int_to_ptr.vmem [resolvable:$true] %s198
          %204 = dma.hbm_to_vmem [thread:$0]  %s197, 1024, %s199, %s188, 256, 256, 16
        $region36: #{tpu_custom_call.1} parent=31 // pred_fallthru
          _
      $region32: #{tpu_custom_call.1} parent=5 // pred_fallthru
        _
      %p205 = scmp.le.s32.totalorder 1, %s17
      %p206 = scmp.lt.s32.totalorder %s17, 3
      %p207 = pnand %p205, %p206
      %p208 = pneg %p207
      // Predicated region
      $region37: #{tpu_custom_call.1} parent=5 // pred_check
        _
      $region38: #{tpu_custom_call.1} parent=5 // pred_check_branch
        %210 = sbr.rel (%p207) target = $region40
      $region39: #{tpu_custom_call.1} parent=5 // pred_region
        %s211 = ssub.s32 %s17, 1
        %s212 = sand.u32 %s30, 1
        %s213 = scalar_lea.sflag [#allocation3], %s212
        %s214 = sand.u32 %s30, 1
        %s215 = smul.addr %s214, 64
        %s216 = scalar_lea.vmem [#allocation2], %s215
        // Predicated region
        $region41: #{tpu_custom_call.1} parent=39 // pred_check
          %p217 = pneg %p43
        $region42: #{tpu_custom_call.1} parent=39 // pred_check_branch
          %219 = sbr.rel (%p217) target = $region44
        $region43: #{tpu_custom_call.1} parent=39 // pred_region
          %220 = dma.done %s213, 1024
        $region44: #{tpu_custom_call.1} parent=39 // pred_fallthru
          _
        %s221 = sand.u32 %s30, 1
        %s222 = scalar_lea.sflag [#allocation3], %s221
        %s223 = sand.u32 %s30, 1
        %s224 = smul.addr %s223, 64
        %s225 = scalar_lea.vmem [#allocation2], %s224
        %p226 = pneg %p43
        %p227 = pneg %p40
        %p228 = pneg %p64
        %p229 = pneg %p61
        %p230 = pneg %p85
        %p231 = pneg %p82
        %p232 = pneg %p106
        %p233 = pneg %p103
        %p234 = pneg %p127
        %p235 = pneg %p124
        %p236 = pneg %p153
        %p237 = pneg %p150
        %s238 = sand.u32 %s140, 1
        %s239 = scalar_lea.sflag [#allocation4], %s238
        %s240 = sand.u32 %s140, 1
        %s241 = smul.addr %s240, 64
        %s242 = scalar_lea.vmem [#allocation5], %s241
        %v243 = vld [vmem:[%s216] sm:$0xff]
        %v244 = vld [vmem:[%s216 + $0x8] sm:$0xff]
        %v245 = vld [vmem:[%s216 + $0x10] sm:$0xff]
        %v246 = vld [vmem:[%s216 + $0x18] sm:$0xff]
        %v247 = vld [vmem:[%s216 + $0x20] sm:$0xff]
        %v248 = vld [vmem:[%s216 + $0x28] sm:$0xff]
        %v249 = vld [vmem:[%s216 + $0x30] sm:$0xff]
        %v250 = vld [vmem:[%s216 + $0x38] sm:$0xff]
        %v251 = vadd.f32 %v243, %v244
        %252 = vadd.xlane.f32.xlu0 %v251
        %v253 = vpop.xlane.xlu0 %252
        %v254 = vadd.f32 %v245, %v246
        %255 = vadd.xlane.f32.xlu0 %v254
        %v256 = vpop.xlane.xlu0 %255
        %v257 = vadd.f32 %v247, %v248
        %258 = vadd.xlane.f32.xlu0 %v257
        %v259 = vpop.xlane.xlu0 %258
        %v260 = vadd.f32 %v249, %v250
        %261 = vadd.xlane.f32.xlu0 %v260
        %v262 = vpop.xlane.xlu0 %261
        %v263 = vmax.f32 %v243, %v244
        %264 = vmax.xlane.f32.xlu0 %v263
        %v265 = vpop.xlane.xlu0 %264
        %v266 = vmax.f32 %v245, %v246
        %267 = vmax.xlane.f32.xlu0 %v266
        %v268 = vpop.xlane.xlu0 %267
        %v269 = vmax.f32 %v247, %v248
        %270 = vmax.xlane.f32.xlu0 %v269
        %v271 = vpop.xlane.xlu0 %270
        %v272 = vmax.f32 %v249, %v250
        %273 = vmax.xlane.f32.xlu0 %v272
        %v274 = vpop.xlane.xlu0 %273
        %v275 = vmul.f32 %v253, 0.00390625
        %v276 = vmul.f32 %v256, 0.00390625
        %v277 = vmul.f32 %v259, 0.00390625
        %v278 = vmul.f32 %v262, 0.00390625
        %v283 = vlaneseq
        %v284 = vand.u32 %v283, 127
        %v285 = vlaneseq
        %v286 = vshrl.u32 %v285, 7
        %v287 = vsub.s32 %v284, %v286
        %v288 = vrot.slane %v275, %v287
        %v289 = vadd.s32 %v284, 4294967288
        %v290 = vlaneseq
        %v291 = vshrl.u32 %v290, 7
        %v292 = vsub.s32 %v289, %v291
        %v293 = vrot.slane %v276, %v292
        %vm294 = vcmask 130112
        %v295 = vsel %vm294, %v293, %v288
        %v296 = vadd.s32 %v284, 4294967280
        %v297 = vlaneseq
        %v298 = vshrl.u32 %v297, 7
        %v299 = vsub.s32 %v296, %v298
        %v300 = vrot.slane %v277, %v299
        %vm301 = vcmask 195712
        %v302 = vsel %vm301, %v300, %v295
        %v303 = vadd.s32 %v284, 4294967272
        %v304 = vlaneseq
        %v305 = vshrl.u32 %v304, 7
        %v306 = vsub.s32 %v303, %v305
        %v307 = vrot.slane %v278, %v306
        %vm308 = vcmask 261312
        %v309 = vsel %vm308, %v307, %v302
        %v315 = vlaneseq
        %v316 = vshrl.u32 %v315, 7
        %v317 = vsub.s32 %v284, %v316
        %v318 = vrot.slane %v265, %v317
        %v319 = vlaneseq
        %v320 = vshrl.u32 %v319, 7
        %v321 = vsub.s32 %v289, %v320
        %v322 = vrot.slane %v268, %v321
        %v323 = vsel %vm294, %v322, %v318
        %v324 = vlaneseq
        %v325 = vshrl.u32 %v324, 7
        %v326 = vsub.s32 %v296, %v325
        %v327 = vrot.slane %v271, %v326
        %v328 = vsel %vm301, %v327, %v323
        %v329 = vlaneseq
        %v330 = vshrl.u32 %v329, 7
        %v331 = vsub.s32 %v303, %v330
        %v332 = vrot.slane %v274, %v331
        %v333 = vsel %vm308, %v332, %v328
        %vm335 = vcmask 1040384
        %v336 = vsel %vm335, %v309, %v333
        %v337 = vld [vmem:[%s1] sm:$0x3]
        %v338 = vld [vmem:[%s2] sm:$0x1]
        %v339 = vld [vmem:[%s3] sm:$0xff]
        %v340 = vld [vmem:[%s3 + $0x8] sm:$0xff]
        %v341 = vld [vmem:[%s3 + $0x10] sm:$0xff]
        %v342 = vld [vmem:[%s3 + $0x18] sm:$0xff]
        %v343 = vld [vmem:[%s4] sm:$0x1]
        %v346 = vunpack.c.l.s4 1966171168
        %v347 = vunpack.c.0.s8 %v346
        %v348 = vlaneseq
        %v349 = vshrl.u32 %v348, 7
        %v350 = vsub.s32 %v347, %v349
        %v351 = vrot.slane %v336, %v350
        %v352 = vcombine.high %v351, %v351
        %v354 = vunpack.c.l.s4 1966171168
        %v355 = vunpack.c.0.s8 %v354
        %v356 = vlaneseq
        %v357 = vshrl.u32 %v356, 7
        %v358 = vsub.s32 %v355, %v357
        %v359 = vrot.slane %v351, %v358
        %v361 = vunpack.c.l.s4 1966171168
        %v362 = vunpack.c.0.s8 %v361
        %v363 = vlaneseq
        %v364 = vshrl.u32 %v363, 7
        %v365 = vsub.s32 %v362, %v364
        %v366 = vrot.slane %v352, %v365
        %v367 = vlaneseq
        %v368 = vshrl.u32 %v367, 7
        %v369 = vsub.s32 0, %v368
        %v370 = vrot.slane %v359, %v369
        %v371 = vlaneseq
        %v372 = vshrl.u32 %v371, 7
        %v373 = vsub.s32 0, %v372
        %v374 = vrot.slane %v366, %v373
        %v377 = vmul.f32 %v370, %v337
        %v378 = vmul.f32 %v374, %v337
        %vm379 = vcmask 254976
        %v380 = vsel %vm379, %v377, 0.0
        %381 = vadd.xlane.f32.xlu0 %v380
        %v382 = vpop.xlane.xlu0 %381
        %v383 = vsel %vm379, %v378, 0.0
        %384 = vadd.xlane.f32.xlu0 %v383
        %v385 = vpop.xlane.xlu0 %384
        %v387 = vlaneseq
        %v388 = vshrl.u32 %v387, 7
        %v389 = vsub.s32 0, %v388
        %v390 = vrot.slane %v338, %v389
        %392 = vbcast.lane.b32.xlu0 %v390, 256
        %v393 = vpop.permute.xlu0 %392
        %v395 = vadd.f32 %v382, %v393
        %v396 = vadd.f32 %v385, %v393
        %v397 = vmax.f32 %v395, 0.0
        %v398 = vmax.f32 %v396, 0.0
        %v403 = vlaneseq
        %v404 = vshrl.u32 %v403, 7
        %v405 = vsub.s32 0, %v404
        %v406 = vrot.slane %v339, %v405
        %408 = vbcast.lane.b32.xlu0 %v406, 256
        %v409 = vpop.permute.xlu0 %408
        %v410 = vlaneseq
        %v411 = vshrl.u32 %v410, 7
        %v412 = vsub.s32 1, %v411
        %v413 = vrot.slane %v339, %v412
        %415 = vbcast.lane.b32.xlu0 %v413, 256
        %v416 = vpop.permute.xlu0 %415
        %v417 = vlaneseq
        %v418 = vshrl.u32 %v417, 7
        %v419 = vsub.s32 2, %v418
        %v420 = vrot.slane %v339, %v419
        %422 = vbcast.lane.b32.xlu0 %v420, 256
        %v423 = vpop.permute.xlu0 %422
        %v424 = vlaneseq
        %v425 = vshrl.u32 %v424, 7
        %v426 = vsub.s32 3, %v425
        %v427 = vrot.slane %v339, %v426
        %429 = vbcast.lane.b32.xlu0 %v427, 256
        %v430 = vpop.permute.xlu0 %429
        %v431 = vlaneseq
        %v432 = vshrl.u32 %v431, 7
        %v433 = vsub.s32 4, %v432
        %v434 = vrot.slane %v339, %v433
        %436 = vbcast.lane.b32.xlu0 %v434, 256
        %v437 = vpop.permute.xlu0 %436
        %v438 = vlaneseq
        %v439 = vshrl.u32 %v438, 7
        %v440 = vsub.s32 5, %v439
        %v441 = vrot.slane %v339, %v440
        %443 = vbcast.lane.b32.xlu0 %v441, 256
        %v444 = vpop.permute.xlu0 %443
        %v445 = vlaneseq
        %v446 = vshrl.u32 %v445, 7
        %v447 = vsub.s32 6, %v446
        %v448 = vrot.slane %v339, %v447
        %450 = vbcast.lane.b32.xlu0 %v448, 256
        %v451 = vpop.permute.xlu0 %450
        %v452 = vlaneseq
        %v453 = vshrl.u32 %v452, 7
        %v454 = vsub.s32 7, %v453
        %v455 = vrot.slane %v339, %v454
        %457 = vbcast.lane.b32.xlu0 %v455, 256
        %v458 = vpop.permute.xlu0 %457
        %v459 = vlaneseq
        %v460 = vshrl.u32 %v459, 7
        %v461 = vsub.s32 0, %v460
        %v462 = vrot.slane %v340, %v461
        %464 = vbcast.lane.b32.xlu0 %v462, 256
        %v465 = vpop.permute.xlu0 %464
        %v466 = vlaneseq
        %v467 = vshrl.u32 %v466, 7
        %v468 = vsub.s32 1, %v467
        %v469 = vrot.slane %v340, %v468
        %471 = vbcast.lane.b32.xlu0 %v469, 256
        %v472 = vpop.permute.xlu0 %471
        %v473 = vlaneseq
        %v474 = vshrl.u32 %v473, 7
        %v475 = vsub.s32 2, %v474
        %v476 = vrot.slane %v340, %v475
        %478 = vbcast.lane.b32.xlu0 %v476, 256
        %v479 = vpop.permute.xlu0 %478
        %v480 = vlaneseq
        %v481 = vshrl.u32 %v480, 7
        %v482 = vsub.s32 3, %v481
        %v483 = vrot.slane %v340, %v482
        %485 = vbcast.lane.b32.xlu0 %v483, 256
        %v486 = vpop.permute.xlu0 %485
        %v487 = vlaneseq
        %v488 = vshrl.u32 %v487, 7
        %v489 = vsub.s32 4, %v488
        %v490 = vrot.slane %v340, %v489
        %492 = vbcast.lane.b32.xlu0 %v490, 256
        %v493 = vpop.permute.xlu0 %492
        %v494 = vlaneseq
        %v495 = vshrl.u32 %v494, 7
        %v496 = vsub.s32 5, %v495
        %v497 = vrot.slane %v340, %v496
        %499 = vbcast.lane.b32.xlu0 %v497, 256
        %v500 = vpop.permute.xlu0 %499
        %v501 = vlaneseq
        %v502 = vshrl.u32 %v501, 7
        %v503 = vsub.s32 6, %v502
        %v504 = vrot.slane %v340, %v503
        %506 = vbcast.lane.b32.xlu0 %v504, 256
        %v507 = vpop.permute.xlu0 %506
        %v508 = vlaneseq
        %v509 = vshrl.u32 %v508, 7
        %v510 = vsub.s32 7, %v509
        %v511 = vrot.slane %v340, %v510
        %513 = vbcast.lane.b32.xlu0 %v511, 256
        %v514 = vpop.permute.xlu0 %513
        %v515 = vlaneseq
        %v516 = vshrl.u32 %v515, 7
        %v517 = vsub.s32 0, %v516
        %v518 = vrot.slane %v341, %v517
        %520 = vbcast.lane.b32.xlu0 %v518, 256
        %v521 = vpop.permute.xlu0 %520
        %v522 = vlaneseq
        %v523 = vshrl.u32 %v522, 7
        %v524 = vsub.s32 1, %v523
        %v525 = vrot.slane %v341, %v524
        %527 = vbcast.lane.b32.xlu0 %v525, 256
        %v528 = vpop.permute.xlu0 %527
        %v529 = vlaneseq
        %v530 = vshrl.u32 %v529, 7
        %v531 = vsub.s32 2, %v530
        %v532 = vrot.slane %v341, %v531
        %534 = vbcast.lane.b32.xlu0 %v532, 256
        %v535 = vpop.permute.xlu0 %534
        %v536 = vlaneseq
        %v537 = vshrl.u32 %v536, 7
        %v538 = vsub.s32 3, %v537
        %v539 = vrot.slane %v341, %v538
        %541 = vbcast.lane.b32.xlu0 %v539, 256
        %v542 = vpop.permute.xlu0 %541
        %v543 = vlaneseq
        %v544 = vshrl.u32 %v543, 7
        %v545 = vsub.s32 4, %v544
        %v546 = vrot.slane %v341, %v545
        %548 = vbcast.lane.b32.xlu0 %v546, 256
        %v549 = vpop.permute.xlu0 %548
        %v550 = vlaneseq
        %v551 = vshrl.u32 %v550, 7
        %v552 = vsub.s32 5, %v551
        %v553 = vrot.slane %v341, %v552
        %555 = vbcast.lane.b32.xlu0 %v553, 256
        %v556 = vpop.permute.xlu0 %555
        %v557 = vlaneseq
        %v558 = vshrl.u32 %v557, 7
        %v559 = vsub.s32 6, %v558
        %v560 = vrot.slane %v341, %v559
        %562 = vbcast.lane.b32.xlu0 %v560, 256
        %v563 = vpop.permute.xlu0 %562
        %v564 = vlaneseq
        %v565 = vshrl.u32 %v564, 7
        %v566 = vsub.s32 7, %v565
        %v567 = vrot.slane %v341, %v566
        %569 = vbcast.lane.b32.xlu0 %v567, 256
        %v570 = vpop.permute.xlu0 %569
        %v571 = vlaneseq
        %v572 = vshrl.u32 %v571, 7
        %v573 = vsub.s32 0, %v572
        %v574 = vrot.slane %v342, %v573
        %576 = vbcast.lane.b32.xlu0 %v574, 256
        %v577 = vpop.permute.xlu0 %576
        %v578 = vlaneseq
        %v579 = vshrl.u32 %v578, 7
        %v580 = vsub.s32 1, %v579
        %v581 = vrot.slane %v342, %v580
        %583 = vbcast.lane.b32.xlu0 %v581, 256
        %v584 = vpop.permute.xlu0 %583
        %v585 = vlaneseq
        %v586 = vshrl.u32 %v585, 7
        %v587 = vsub.s32 2, %v586
        %v588 = vrot.slane %v342, %v587
        %590 = vbcast.lane.b32.xlu0 %v588, 256
        %v591 = vpop.permute.xlu0 %590
        %v592 = vlaneseq
        %v593 = vshrl.u32 %v592, 7
        %v594 = vsub.s32 3, %v593
        %v595 = vrot.slane %v342, %v594
        %597 = vbcast.lane.b32.xlu0 %v595, 256
        %v598 = vpop.permute.xlu0 %597
        %v599 = vlaneseq
        %v600 = vshrl.u32 %v599, 7
        %v601 = vsub.s32 4, %v600
        %v602 = vrot.slane %v342, %v601
        %604 = vbcast.lane.b32.xlu0 %v602, 256
        %v605 = vpop.permute.xlu0 %604
        %v606 = vlaneseq
        %v607 = vshrl.u32 %v606, 7
        %v608 = vsub.s32 5, %v607
        %v609 = vrot.slane %v342, %v608
        %611 = vbcast.lane.b32.xlu0 %v609, 256
        %v612 = vpop.permute.xlu0 %611
        %v613 = vlaneseq
        %v614 = vshrl.u32 %v613, 7
        %v615 = vsub.s32 6, %v614
        %v616 = vrot.slane %v342, %v615
        %618 = vbcast.lane.b32.xlu0 %v616, 256
        %v619 = vpop.permute.xlu0 %618
        %v620 = vlaneseq
        %v621 = vshrl.u32 %v620, 7
        %v622 = vsub.s32 7, %v621
        %v623 = vrot.slane %v342, %v622
        %625 = vbcast.lane.b32.xlu0 %v623, 256
        %v626 = vpop.permute.xlu0 %625
        %v659 = vmul.f32 %v397, %v409
        %v660 = vmul.f32 %v397, %v416
        %v661 = vmul.f32 %v397, %v423
        %v662 = vmul.f32 %v397, %v430
        %v663 = vmul.f32 %v397, %v437
        %v664 = vmul.f32 %v397, %v444
        %v665 = vmul.f32 %v397, %v451
        %v666 = vmul.f32 %v397, %v458
        %v667 = vmul.f32 %v397, %v465
        %v668 = vmul.f32 %v397, %v472
        %v669 = vmul.f32 %v397, %v479
        %v670 = vmul.f32 %v397, %v486
        %v671 = vmul.f32 %v397, %v493
        %v672 = vmul.f32 %v397, %v500
        %v673 = vmul.f32 %v397, %v507
        %v674 = vmul.f32 %v397, %v514
        %v675 = vmul.f32 %v397, %v521
        %v676 = vmul.f32 %v397, %v528
        %v677 = vmul.f32 %v397, %v535
        %v678 = vmul.f32 %v397, %v542
        %v679 = vmul.f32 %v397, %v549
        %v680 = vmul.f32 %v397, %v556
        %v681 = vmul.f32 %v397, %v563
        %v682 = vmul.f32 %v397, %v570
        %v683 = vmul.f32 %v397, %v577
        %v684 = vmul.f32 %v397, %v584
        %v685 = vmul.f32 %v397, %v591
        %v686 = vmul.f32 %v397, %v598
        %v687 = vmul.f32 %v397, %v605
        %v688 = vmul.f32 %v397, %v612
        %v689 = vmul.f32 %v397, %v619
        %v690 = vmul.f32 %v397, %v626
        %v691 = vmul.f32 %v398, %v409
        %v692 = vmul.f32 %v398, %v416
        %v693 = vmul.f32 %v398, %v423
        %v694 = vmul.f32 %v398, %v430
        %v695 = vmul.f32 %v398, %v437
        %v696 = vmul.f32 %v398, %v444
        %v697 = vmul.f32 %v398, %v451
        %v698 = vmul.f32 %v398, %v458
        %v699 = vmul.f32 %v398, %v465
        %v700 = vmul.f32 %v398, %v472
        %v701 = vmul.f32 %v398, %v479
        %v702 = vmul.f32 %v398, %v486
        %v703 = vmul.f32 %v398, %v493
        %v704 = vmul.f32 %v398, %v500
        %v705 = vmul.f32 %v398, %v507
        %v706 = vmul.f32 %v398, %v514
        %v707 = vmul.f32 %v398, %v521
        %v708 = vmul.f32 %v398, %v528
        %v709 = vmul.f32 %v398, %v535
        %v710 = vmul.f32 %v398, %v542
        %v711 = vmul.f32 %v398, %v549
        %v712 = vmul.f32 %v398, %v556
        %v713 = vmul.f32 %v398, %v563
        %v714 = vmul.f32 %v398, %v570
        %v715 = vmul.f32 %v398, %v577
        %v716 = vmul.f32 %v398, %v584
        %v717 = vmul.f32 %v398, %v591
        %v718 = vmul.f32 %v398, %v598
        %v719 = vmul.f32 %v398, %v605
        %v720 = vmul.f32 %v398, %v612
        %v721 = vmul.f32 %v398, %v619
        %v722 = vmul.f32 %v398, %v626
        %787 = vset.pattern.permute.xlu0 0
        %788 = vperm.xlu0 %787, %v659
        %v789 = vpop.permute.xlu0 %788
        %790 = vset.pattern.permute.xlu0 0
        %791 = vperm.xlu0 %790, %v660
        %v792 = vpop.permute.xlu0 %791
        %793 = vset.pattern.permute.xlu0 0
        %794 = vperm.xlu0 %793, %v661
        %v795 = vpop.permute.xlu0 %794
        %796 = vset.pattern.permute.xlu0 0
        %797 = vperm.xlu0 %796, %v662
        %v798 = vpop.permute.xlu0 %797
        %799 = vset.pattern.permute.xlu0 0
        %800 = vperm.xlu0 %799, %v663
        %v801 = vpop.permute.xlu0 %800
        %802 = vset.pattern.permute.xlu0 0
        %803 = vperm.xlu0 %802, %v664
        %v804 = vpop.permute.xlu0 %803
        %805 = vset.pattern.permute.xlu0 0
        %806 = vperm.xlu0 %805, %v665
        %v807 = vpop.permute.xlu0 %806
        %808 = vset.pattern.permute.xlu0 0
        %809 = vperm.xlu0 %808, %v666
        %v810 = vpop.permute.xlu0 %809
        %811 = vset.pattern.permute.xlu0 0
        %812 = vperm.xlu0 %811, %v667
        %v813 = vpop.permute.xlu0 %812
        %814 = vset.pattern.permute.xlu0 0
        %815 = vperm.xlu0 %814, %v668
        %v816 = vpop.permute.xlu0 %815
        %817 = vset.pattern.permute.xlu0 0
        %818 = vperm.xlu0 %817, %v669
        %v819 = vpop.permute.xlu0 %818
        %820 = vset.pattern.permute.xlu0 0
        %821 = vperm.xlu0 %820, %v670
        %v822 = vpop.permute.xlu0 %821
        %823 = vset.pattern.permute.xlu0 0
        %824 = vperm.xlu0 %823, %v671
        %v825 = vpop.permute.xlu0 %824
        %826 = vset.pattern.permute.xlu0 0
        %827 = vperm.xlu0 %826, %v672
        %v828 = vpop.permute.xlu0 %827
        %829 = vset.pattern.permute.xlu0 0
        %830 = vperm.xlu0 %829, %v673
        %v831 = vpop.permute.xlu0 %830
        %832 = vset.pattern.permute.xlu0 0
        %833 = vperm.xlu0 %832, %v674
        %v834 = vpop.permute.xlu0 %833
        %835 = vset.pattern.permute.xlu0 0
        %836 = vperm.xlu0 %835, %v675
        %v837 = vpop.permute.xlu0 %836
        %838 = vset.pattern.permute.xlu0 0
        %839 = vperm.xlu0 %838, %v676
        %v840 = vpop.permute.xlu0 %839
        %841 = vset.pattern.permute.xlu0 0
        %842 = vperm.xlu0 %841, %v677
        %v843 = vpop.permute.xlu0 %842
        %844 = vset.pattern.permute.xlu0 0
        %845 = vperm.xlu0 %844, %v678
        %v846 = vpop.permute.xlu0 %845
        %847 = vset.pattern.permute.xlu0 0
        %848 = vperm.xlu0 %847, %v679
        %v849 = vpop.permute.xlu0 %848
        %850 = vset.pattern.permute.xlu0 0
        %851 = vperm.xlu0 %850, %v680
        %v852 = vpop.permute.xlu0 %851
        %853 = vset.pattern.permute.xlu0 0
        %854 = vperm.xlu0 %853, %v681
        %v855 = vpop.permute.xlu0 %854
        %856 = vset.pattern.permute.xlu0 0
        %857 = vperm.xlu0 %856, %v682
        %v858 = vpop.permute.xlu0 %857
        %859 = vset.pattern.permute.xlu0 0
        %860 = vperm.xlu0 %859, %v683
        %v861 = vpop.permute.xlu0 %860
        %862 = vset.pattern.permute.xlu0 0
        %863 = vperm.xlu0 %862, %v684
        %v864 = vpop.permute.xlu0 %863
        %865 = vset.pattern.permute.xlu0 0
        %866 = vperm.xlu0 %865, %v685
        %v867 = vpop.permute.xlu0 %866
        %868 = vset.pattern.permute.xlu0 0
        %869 = vperm.xlu0 %868, %v686
        %v870 = vpop.permute.xlu0 %869
        %871 = vset.pattern.permute.xlu0 0
        %872 = vperm.xlu0 %871, %v687
        %v873 = vpop.permute.xlu0 %872
        %874 = vset.pattern.permute.xlu0 0
        %875 = vperm.xlu0 %874, %v688
        %v876 = vpop.permute.xlu0 %875
        %877 = vset.pattern.permute.xlu0 0
        %878 = vperm.xlu0 %877, %v689
        %v879 = vpop.permute.xlu0 %878
        %880 = vset.pattern.permute.xlu0 0
        %881 = vperm.xlu0 %880, %v690
        %v882 = vpop.permute.xlu0 %881
        %883 = vset.pattern.permute.xlu0 0
        %884 = vperm.xlu0 %883, %v691
        %v885 = vpop.permute.xlu0 %884
        %886 = vset.pattern.permute.xlu0 0
        %887 = vperm.xlu0 %886, %v692
        %v888 = vpop.permute.xlu0 %887
        %889 = vset.pattern.permute.xlu0 0
        %890 = vperm.xlu0 %889, %v693
        %v891 = vpop.permute.xlu0 %890
        %892 = vset.pattern.permute.xlu0 0
        %893 = vperm.xlu0 %892, %v694
        %v894 = vpop.permute.xlu0 %893
        %895 = vset.pattern.permute.xlu0 0
        %896 = vperm.xlu0 %895, %v695
        %v897 = vpop.permute.xlu0 %896
        %898 = vset.pattern.permute.xlu0 0
        %899 = vperm.xlu0 %898, %v696
        %v900 = vpop.permute.xlu0 %899
        %901 = vset.pattern.permute.xlu0 0
        %902 = vperm.xlu0 %901, %v697
        %v903 = vpop.permute.xlu0 %902
        %904 = vset.pattern.permute.xlu0 0
        %905 = vperm.xlu0 %904, %v698
        %v906 = vpop.permute.xlu0 %905
        %907 = vset.pattern.permute.xlu0 0
        %908 = vperm.xlu0 %907, %v699
        %v909 = vpop.permute.xlu0 %908
        %910 = vset.pattern.permute.xlu0 0
        %911 = vperm.xlu0 %910, %v700
        %v912 = vpop.permute.xlu0 %911
        %913 = vset.pattern.permute.xlu0 0
        %914 = vperm.xlu0 %913, %v701
        %v915 = vpop.permute.xlu0 %914
        %916 = vset.pattern.permute.xlu0 0
        %917 = vperm.xlu0 %916, %v702
        %v918 = vpop.permute.xlu0 %917
        %919 = vset.pattern.permute.xlu0 0
        %920 = vperm.xlu0 %919, %v703
        %v921 = vpop.permute.xlu0 %920
        %922 = vset.pattern.permute.xlu0 0
        %923 = vperm.xlu0 %922, %v704
        %v924 = vpop.permute.xlu0 %923
        %925 = vset.pattern.permute.xlu0 0
        %926 = vperm.xlu0 %925, %v705
        %v927 = vpop.permute.xlu0 %926
        %928 = vset.pattern.permute.xlu0 0
        %929 = vperm.xlu0 %928, %v706
        %v930 = vpop.permute.xlu0 %929
        %931 = vset.pattern.permute.xlu0 0
        %932 = vperm.xlu0 %931, %v707
        %v933 = vpop.permute.xlu0 %932
        %934 = vset.pattern.permute.xlu0 0
        %935 = vperm.xlu0 %934, %v708
        %v936 = vpop.permute.xlu0 %935
        %937 = vset.pattern.permute.xlu0 0
        %938 = vperm.xlu0 %937, %v709
        %v939 = vpop.permute.xlu0 %938
        %940 = vset.pattern.permute.xlu0 0
        %941 = vperm.xlu0 %940, %v710
        %v942 = vpop.permute.xlu0 %941
        %943 = vset.pattern.permute.xlu0 0
        %944 = vperm.xlu0 %943, %v711
        %v945 = vpop.permute.xlu0 %944
        %946 = vset.pattern.permute.xlu0 0
        %947 = vperm.xlu0 %946, %v712
        %v948 = vpop.permute.xlu0 %947
        %949 = vset.pattern.permute.xlu0 0
        %950 = vperm.xlu0 %949, %v713
        %v951 = vpop.permute.xlu0 %950
        %952 = vset.pattern.permute.xlu0 0
        %953 = vperm.xlu0 %952, %v714
        %v954 = vpop.permute.xlu0 %953
        %955 = vset.pattern.permute.xlu0 0
        %956 = vperm.xlu0 %955, %v715
        %v957 = vpop.permute.xlu0 %956
        %958 = vset.pattern.permute.xlu0 0
        %959 = vperm.xlu0 %958, %v716
        %v960 = vpop.permute.xlu0 %959
        %961 = vset.pattern.permute.xlu0 0
        %962 = vperm.xlu0 %961, %v717
        %v963 = vpop.permute.xlu0 %962
        %964 = vset.pattern.permute.xlu0 0
        %965 = vperm.xlu0 %964, %v718
        %v966 = vpop.permute.xlu0 %965
        %967 = vset.pattern.permute.xlu0 0
        %968 = vperm.xlu0 %967, %v719
        %v969 = vpop.permute.xlu0 %968
        %970 = vset.pattern.permute.xlu0 0
        %971 = vperm.xlu0 %970, %v720
        %v972 = vpop.permute.xlu0 %971
        %973 = vset.pattern.permute.xlu0 0
        %974 = vperm.xlu0 %973, %v721
        %v975 = vpop.permute.xlu0 %974
        %976 = vset.pattern.permute.xlu0 0
        %977 = vperm.xlu0 %976, %v722
        %v978 = vpop.permute.xlu0 %977
        %v979 = vlaneseq
        %v980 = vshrl.u32 %v979, 7
        %v981 = vsub.s32 %v284, %v980
        %v982 = vrot.slane %v789, %v981
        %v983 = vlaneseq
        %v984 = vshrl.u32 %v983, 7
        %v985 = vsub.s32 %v284, %v984
        %v986 = vrot.slane %v792, %v985
        %v987 = vlaneseq
        %v988 = vshrl.u32 %v987, 7
        %v989 = vsub.s32 %v284, %v988
        %v990 = vrot.slane %v795, %v989
        %v991 = vlaneseq
        %v992 = vshrl.u32 %v991, 7
        %v993 = vsub.s32 %v284, %v992
        %v994 = vrot.slane %v798, %v993
        %v995 = vlaneseq
        %v996 = vshrl.u32 %v995, 7
        %v997 = vsub.s32 %v284, %v996
        %v998 = vrot.slane %v801, %v997
        %v999 = vlaneseq
        %v1000 = vshrl.u32 %v999, 7
        %v1001 = vsub.s32 %v284, %v1000
        %v1002 = vrot.slane %v804, %v1001
        %v1003 = vlaneseq
        %v1004 = vshrl.u32 %v1003, 7
        %v1005 = vsub.s32 %v284, %v1004
        %v1006 = vrot.slane %v807, %v1005
        %v1007 = vlaneseq
        %v1008 = vshrl.u32 %v1007, 7
        %v1009 = vsub.s32 %v284, %v1008
        %v1010 = vrot.slane %v810, %v1009
        %v1011 = vlaneseq
        %v1012 = vshrl.u32 %v1011, 7
        %v1013 = vsub.s32 %v284, %v1012
        %v1014 = vrot.slane %v813, %v1013
        %v1015 = vlaneseq
        %v1016 = vshrl.u32 %v1015, 7
        %v1017 = vsub.s32 %v284, %v1016
        %v1018 = vrot.slane %v816, %v1017
        %v1019 = vlaneseq
        %v1020 = vshrl.u32 %v1019, 7
        %v1021 = vsub.s32 %v284, %v1020
        %v1022 = vrot.slane %v819, %v1021
        %v1023 = vlaneseq
        %v1024 = vshrl.u32 %v1023, 7
        %v1025 = vsub.s32 %v284, %v1024
        %v1026 = vrot.slane %v822, %v1025
        %v1027 = vlaneseq
        %v1028 = vshrl.u32 %v1027, 7
        %v1029 = vsub.s32 %v284, %v1028
        %v1030 = vrot.slane %v825, %v1029
        %v1031 = vlaneseq
        %v1032 = vshrl.u32 %v1031, 7
        %v1033 = vsub.s32 %v284, %v1032
        %v1034 = vrot.slane %v828, %v1033
        %v1035 = vlaneseq
        %v1036 = vshrl.u32 %v1035, 7
        %v1037 = vsub.s32 %v284, %v1036
        %v1038 = vrot.slane %v831, %v1037
        %v1039 = vlaneseq
        %v1040 = vshrl.u32 %v1039, 7
        %v1041 = vsub.s32 %v284, %v1040
        %v1042 = vrot.slane %v834, %v1041
        %v1043 = vlaneseq
        %v1044 = vshrl.u32 %v1043, 7
        %v1045 = vsub.s32 %v284, %v1044
        %v1046 = vrot.slane %v837, %v1045
        %v1047 = vlaneseq
        %v1048 = vshrl.u32 %v1047, 7
        %v1049 = vsub.s32 %v284, %v1048
        %v1050 = vrot.slane %v840, %v1049
        %v1051 = vlaneseq
        %v1052 = vshrl.u32 %v1051, 7
        %v1053 = vsub.s32 %v284, %v1052
        %v1054 = vrot.slane %v843, %v1053
        %v1055 = vlaneseq
        %v1056 = vshrl.u32 %v1055, 7
        %v1057 = vsub.s32 %v284, %v1056
        %v1058 = vrot.slane %v846, %v1057
        %v1059 = vlaneseq
        %v1060 = vshrl.u32 %v1059, 7
        %v1061 = vsub.s32 %v284, %v1060
        %v1062 = vrot.slane %v849, %v1061
        %v1063 = vlaneseq
        %v1064 = vshrl.u32 %v1063, 7
        %v1065 = vsub.s32 %v284, %v1064
        %v1066 = vrot.slane %v852, %v1065
        %v1067 = vlaneseq
        %v1068 = vshrl.u32 %v1067, 7
        %v1069 = vsub.s32 %v284, %v1068
        %v1070 = vrot.slane %v855, %v1069
        %v1071 = vlaneseq
        %v1072 = vshrl.u32 %v1071, 7
        %v1073 = vsub.s32 %v284, %v1072
        %v1074 = vrot.slane %v858, %v1073
        %v1075 = vlaneseq
        %v1076 = vshrl.u32 %v1075, 7
        %v1077 = vsub.s32 %v284, %v1076
        %v1078 = vrot.slane %v861, %v1077
        %v1079 = vlaneseq
        %v1080 = vshrl.u32 %v1079, 7
        %v1081 = vsub.s32 %v284, %v1080
        %v1082 = vrot.slane %v864, %v1081
        %v1083 = vlaneseq
        %v1084 = vshrl.u32 %v1083, 7
        %v1085 = vsub.s32 %v284, %v1084
        %v1086 = vrot.slane %v867, %v1085
        %v1087 = vlaneseq
        %v1088 = vshrl.u32 %v1087, 7
        %v1089 = vsub.s32 %v284, %v1088
        %v1090 = vrot.slane %v870, %v1089
        %v1091 = vlaneseq
        %v1092 = vshrl.u32 %v1091, 7
        %v1093 = vsub.s32 %v284, %v1092
        %v1094 = vrot.slane %v873, %v1093
        %v1095 = vlaneseq
        %v1096 = vshrl.u32 %v1095, 7
        %v1097 = vsub.s32 %v284, %v1096
        %v1098 = vrot.slane %v876, %v1097
        %v1099 = vlaneseq
        %v1100 = vshrl.u32 %v1099, 7
        %v1101 = vsub.s32 %v284, %v1100
        %v1102 = vrot.slane %v879, %v1101
        %v1103 = vlaneseq
        %v1104 = vshrl.u32 %v1103, 7
        %v1105 = vsub.s32 %v284, %v1104
        %v1106 = vrot.slane %v882, %v1105
        %v1107 = vlaneseq
        %v1108 = vshrl.u32 %v1107, 7
        %v1109 = vsub.s32 %v284, %v1108
        %v1110 = vrot.slane %v885, %v1109
        %v1111 = vlaneseq
        %v1112 = vshrl.u32 %v1111, 7
        %v1113 = vsub.s32 %v284, %v1112
        %v1114 = vrot.slane %v888, %v1113
        %v1115 = vlaneseq
        %v1116 = vshrl.u32 %v1115, 7
        %v1117 = vsub.s32 %v284, %v1116
        %v1118 = vrot.slane %v891, %v1117
        %v1119 = vlaneseq
        %v1120 = vshrl.u32 %v1119, 7
        %v1121 = vsub.s32 %v284, %v1120
        %v1122 = vrot.slane %v894, %v1121
        %v1123 = vlaneseq
        %v1124 = vshrl.u32 %v1123, 7
        %v1125 = vsub.s32 %v284, %v1124
        %v1126 = vrot.slane %v897, %v1125
        %v1127 = vlaneseq
        %v1128 = vshrl.u32 %v1127, 7
        %v1129 = vsub.s32 %v284, %v1128
        %v1130 = vrot.slane %v900, %v1129
        %v1131 = vlaneseq
        %v1132 = vshrl.u32 %v1131, 7
        %v1133 = vsub.s32 %v284, %v1132
        %v1134 = vrot.slane %v903, %v1133
        %v1135 = vlaneseq
        %v1136 = vshrl.u32 %v1135, 7
        %v1137 = vsub.s32 %v284, %v1136
        %v1138 = vrot.slane %v906, %v1137
        %v1139 = vlaneseq
        %v1140 = vshrl.u32 %v1139, 7
        %v1141 = vsub.s32 %v284, %v1140
        %v1142 = vrot.slane %v909, %v1141
        %v1143 = vlaneseq
        %v1144 = vshrl.u32 %v1143, 7
        %v1145 = vsub.s32 %v284, %v1144
        %v1146 = vrot.slane %v912, %v1145
        %v1147 = vlaneseq
        %v1148 = vshrl.u32 %v1147, 7
        %v1149 = vsub.s32 %v284, %v1148
        %v1150 = vrot.slane %v915, %v1149
        %v1151 = vlaneseq
        %v1152 = vshrl.u32 %v1151, 7
        %v1153 = vsub.s32 %v284, %v1152
        %v1154 = vrot.slane %v918, %v1153
        %v1155 = vlaneseq
        %v1156 = vshrl.u32 %v1155, 7
        %v1157 = vsub.s32 %v284, %v1156
        %v1158 = vrot.slane %v921, %v1157
        %v1159 = vlaneseq
        %v1160 = vshrl.u32 %v1159, 7
        %v1161 = vsub.s32 %v284, %v1160
        %v1162 = vrot.slane %v924, %v1161
        %v1163 = vlaneseq
        %v1164 = vshrl.u32 %v1163, 7
        %v1165 = vsub.s32 %v284, %v1164
        %v1166 = vrot.slane %v927, %v1165
        %v1167 = vlaneseq
        %v1168 = vshrl.u32 %v1167, 7
        %v1169 = vsub.s32 %v284, %v1168
        %v1170 = vrot.slane %v930, %v1169
        %v1171 = vlaneseq
        %v1172 = vshrl.u32 %v1171, 7
        %v1173 = vsub.s32 %v284, %v1172
        %v1174 = vrot.slane %v933, %v1173
        %v1175 = vlaneseq
        %v1176 = vshrl.u32 %v1175, 7
        %v1177 = vsub.s32 %v284, %v1176
        %v1178 = vrot.slane %v936, %v1177
        %v1179 = vlaneseq
        %v1180 = vshrl.u32 %v1179, 7
        %v1181 = vsub.s32 %v284, %v1180
        %v1182 = vrot.slane %v939, %v1181
        %v1183 = vlaneseq
        %v1184 = vshrl.u32 %v1183, 7
        %v1185 = vsub.s32 %v284, %v1184
        %v1186 = vrot.slane %v942, %v1185
        %v1187 = vlaneseq
        %v1188 = vshrl.u32 %v1187, 7
        %v1189 = vsub.s32 %v284, %v1188
        %v1190 = vrot.slane %v945, %v1189
        %v1191 = vlaneseq
        %v1192 = vshrl.u32 %v1191, 7
        %v1193 = vsub.s32 %v284, %v1192
        %v1194 = vrot.slane %v948, %v1193
        %v1195 = vlaneseq
        %v1196 = vshrl.u32 %v1195, 7
        %v1197 = vsub.s32 %v284, %v1196
        %v1198 = vrot.slane %v951, %v1197
        %v1199 = vlaneseq
        %v1200 = vshrl.u32 %v1199, 7
        %v1201 = vsub.s32 %v284, %v1200
        %v1202 = vrot.slane %v954, %v1201
        %v1203 = vlaneseq
        %v1204 = vshrl.u32 %v1203, 7
        %v1205 = vsub.s32 %v284, %v1204
        %v1206 = vrot.slane %v957, %v1205
        %v1207 = vlaneseq
        %v1208 = vshrl.u32 %v1207, 7
        %v1209 = vsub.s32 %v284, %v1208
        %v1210 = vrot.slane %v960, %v1209
        %v1211 = vlaneseq
        %v1212 = vshrl.u32 %v1211, 7
        %v1213 = vsub.s32 %v284, %v1212
        %v1214 = vrot.slane %v963, %v1213
        %v1215 = vlaneseq
        %v1216 = vshrl.u32 %v1215, 7
        %v1217 = vsub.s32 %v284, %v1216
        %v1218 = vrot.slane %v966, %v1217
        %v1219 = vlaneseq
        %v1220 = vshrl.u32 %v1219, 7
        %v1221 = vsub.s32 %v284, %v1220
        %v1222 = vrot.slane %v969, %v1221
        %v1223 = vlaneseq
        %v1224 = vshrl.u32 %v1223, 7
        %v1225 = vsub.s32 %v284, %v1224
        %v1226 = vrot.slane %v972, %v1225
        %v1227 = vlaneseq
        %v1228 = vshrl.u32 %v1227, 7
        %v1229 = vsub.s32 %v284, %v1228
        %v1230 = vrot.slane %v975, %v1229
        %v1231 = vlaneseq
        %v1232 = vshrl.u32 %v1231, 7
        %v1233 = vsub.s32 %v284, %v1232
        %v1234 = vrot.slane %v978, %v1233
        %vm1235 = vcmask 1041409
        %v1236 = vsel %vm1235, %v986, %v982
        %vm1237 = vcmask 1042434
        %v1238 = vsel %vm1237, %v990, %v1236
        %vm1239 = vcmask 1043459
        %v1240 = vsel %vm1239, %v994, %v1238
        %vm1241 = vcmask 1044484
        %v1242 = vsel %vm1241, %v998, %v1240
        %vm1243 = vcmask 1045509
        %v1244 = vsel %vm1243, %v1002, %v1242
        %vm1245 = vcmask 1046534
        %v1246 = vsel %vm1245, %v1006, %v1244
        %vm1247 = vcmask 1047559
        %v1248 = vsel %vm1247, %v1010, %v1246
        %v1249 = vsel %vm1235, %v1018, %v1014
        %v1250 = vsel %vm1237, %v1022, %v1249
        %v1251 = vsel %vm1239, %v1026, %v1250
        %v1252 = vsel %vm1241, %v1030, %v1251
        %v1253 = vsel %vm1243, %v1034, %v1252
        %v1254 = vsel %vm1245, %v1038, %v1253
        %v1255 = vsel %vm1247, %v1042, %v1254
        %v1256 = vsel %vm1235, %v1050, %v1046
        %v1257 = vsel %vm1237, %v1054, %v1256
        %v1258 = vsel %vm1239, %v1058, %v1257
        %v1259 = vsel %vm1241, %v1062, %v1258
        %v1260 = vsel %vm1243, %v1066, %v1259
        %v1261 = vsel %vm1245, %v1070, %v1260
        %v1262 = vsel %vm1247, %v1074, %v1261
        %v1263 = vsel %vm1235, %v1082, %v1078
        %v1264 = vsel %vm1237, %v1086, %v1263
        %v1265 = vsel %vm1239, %v1090, %v1264
        %v1266 = vsel %vm1241, %v1094, %v1265
        %v1267 = vsel %vm1243, %v1098, %v1266
        %v1268 = vsel %vm1245, %v1102, %v1267
        %v1269 = vsel %vm1247, %v1106, %v1268
        %v1270 = vsel %vm1235, %v1114, %v1110
        %v1271 = vsel %vm1237, %v1118, %v1270
        %v1272 = vsel %vm1239, %v1122, %v1271
        %v1273 = vsel %vm1241, %v1126, %v1272
        %v1274 = vsel %vm1243, %v1130, %v1273
        %v1275 = vsel %vm1245, %v1134, %v1274
        %v1276 = vsel %vm1247, %v1138, %v1275
        %v1277 = vsel %vm1235, %v1146, %v1142
        %v1278 = vsel %vm1237, %v1150, %v1277
        %v1279 = vsel %vm1239, %v1154, %v1278
        %v1280 = vsel %vm1241, %v1158, %v1279
        %v1281 = vsel %vm1243, %v1162, %v1280
        %v1282 = vsel %vm1245, %v1166, %v1281
        %v1283 = vsel %vm1247, %v1170, %v1282
        %v1284 = vsel %vm1235, %v1178, %v1174
        %v1285 = vsel %vm1237, %v1182, %v1284
        %v1286 = vsel %vm1239, %v1186, %v1285
        %v1287 = vsel %vm1241, %v1190, %v1286
        %v1288 = vsel %vm1243, %v1194, %v1287
        %v1289 = vsel %vm1245, %v1198, %v1288
        %v1290 = vsel %vm1247, %v1202, %v1289
        %v1291 = vsel %vm1235, %v1210, %v1206
        %v1292 = vsel %vm1237, %v1214, %v1291
        %v1293 = vsel %vm1239, %v1218, %v1292
        %v1294 = vsel %vm1241, %v1222, %v1293
        %v1295 = vsel %vm1243, %v1226, %v1294
        %v1296 = vsel %vm1245, %v1230, %v1295
        %v1297 = vsel %vm1247, %v1234, %v1296
        %vm1306 = vcmask 15360
        %v1307 = vsel %vm1306, %v1248, 0.0
        %1308 = vadd.xlane.f32.xlu0 %v1307
        %v1309 = vpop.xlane.xlu0 %1308
        %v1310 = vsel %vm1306, %v1255, 0.0
        %1311 = vadd.xlane.f32.xlu0 %v1310
        %v1312 = vpop.xlane.xlu0 %1311
        %v1313 = vsel %vm1306, %v1262, 0.0
        %1314 = vadd.xlane.f32.xlu0 %v1313
        %v1315 = vpop.xlane.xlu0 %1314
        %v1316 = vsel %vm1306, %v1269, 0.0
        %1317 = vadd.xlane.f32.xlu0 %v1316
        %v1318 = vpop.xlane.xlu0 %1317
        %v1319 = vsel %vm1306, %v1276, 0.0
        %1320 = vadd.xlane.f32.xlu0 %v1319
        %v1321 = vpop.xlane.xlu0 %1320
        %v1322 = vsel %vm1306, %v1283, 0.0
        %1323 = vadd.xlane.f32.xlu0 %v1322
        %v1324 = vpop.xlane.xlu0 %1323
        %v1325 = vsel %vm1306, %v1290, 0.0
        %1326 = vadd.xlane.f32.xlu0 %v1325
        %v1327 = vpop.xlane.xlu0 %1326
        %v1328 = vsel %vm1306, %v1297, 0.0
        %1329 = vadd.xlane.f32.xlu0 %v1328
        %v1330 = vpop.xlane.xlu0 %1329
        %v1332 = vlaneseq
        %v1333 = vshrl.u32 %v1332, 7
        %v1334 = vsub.s32 0, %v1333
        %v1335 = vrot.slane %v343, %v1334
        %1337 = vbcast.lane.b32.xlu0 %v1335, 256
        %v1338 = vpop.permute.xlu0 %1337
        %s1340 = sor.u32 256, 8
        %1341 = vbcast.lane.b32.xlu0 %v1335, %s1340
        %v1342 = vpop.permute.xlu0 %1341
        %s1344 = sor.u32 256, 16
        %1345 = vbcast.lane.b32.xlu0 %v1335, %s1344
        %v1346 = vpop.permute.xlu0 %1345
        %s1348 = sor.u32 256, 24
        %1349 = vbcast.lane.b32.xlu0 %v1335, %s1348
        %v1350 = vpop.permute.xlu0 %1349
        %v1355 = vadd.f32 %v1309, %v1338
        %v1356 = vadd.f32 %v1312, %v1342
        %v1357 = vadd.f32 %v1315, %v1346
        %v1358 = vadd.f32 %v1318, %v1350
        %v1359 = vadd.f32 %v1321, %v1338
        %v1360 = vadd.f32 %v1324, %v1342
        %v1361 = vadd.f32 %v1327, %v1346
        %v1362 = vadd.f32 %v1330, %v1350
        %v1363 = vadd.f32 %v1355, %v1359
        %v1364 = vadd.f32 %v1356, %v1360
        %v1365 = vadd.f32 %v1357, %v1361
        %v1366 = vadd.f32 %v1358, %v1362
        %v1367 = vxor.u32 %v1363, 2147483648
        %v1368 = vxor.u32 %v1364, 2147483648
        %v1369 = vxor.u32 %v1365, 2147483648
        %v1370 = vxor.u32 %v1366, 2147483648
        %v1371 = vmul.f32 %v1367, 1.442695
        %v1372 = vpow.pop %v1371
        %v1373 = vmul.f32 %v1368, 1.442695
        %v1374 = vpow.pop %v1373
        %v1375 = vmul.f32 %v1369, 1.442695
        %v1376 = vpow.pop %v1375
        %v1377 = vmul.f32 %v1370, 1.442695
        %v1378 = vpow.pop %v1377
        %v1379 = vadd.f32 %v1372, 1.0
        %v1380 = vadd.f32 %v1374, 1.0
        %v1381 = vadd.f32 %v1376, 1.0
        %v1382 = vadd.f32 %v1378, 1.0
        %v1383 = vrcp.pop %v1379
        %v1384 = vmul.f32 1.0, %v1383
        %v1385 = vrcp.pop %v1380
        %v1386 = vmul.f32 1.0, %v1385
        %v1387 = vrcp.pop %v1381
        %v1388 = vmul.f32 1.0, %v1387
        %v1389 = vrcp.pop %v1382
        %v1390 = vmul.f32 1.0, %v1389
        %1392 = vset.pattern.permute.xlu0 0
        %1393 = vperm.xlu0 %1392, %v1384
        %v1394 = vpop.permute.xlu0 %1393
        %1397 = vset.pattern.permute.xlu0 0
        %1398 = vperm.xlu0 %1397, %v1386
        %v1399 = vpop.permute.xlu0 %1398
        %1402 = vset.pattern.permute.xlu0 0
        %1403 = vperm.xlu0 %1402, %v1388
        %v1404 = vpop.permute.xlu0 %1403
        %1407 = vset.pattern.permute.xlu0 0
        %1408 = vperm.xlu0 %1407, %v1390
        %v1409 = vpop.permute.xlu0 %1408
        %v1411 = vmul.f32 %v243, %v1394
        %v1412 = vmul.f32 %v244, %v1394
        %v1413 = vmul.f32 %v245, %v1399
        %v1414 = vmul.f32 %v246, %v1399
        %v1415 = vmul.f32 %v247, %v1404
        %v1416 = vmul.f32 %v248, %v1404
        %v1417 = vmul.f32 %v249, %v1409
        %v1418 = vmul.f32 %v250, %v1409
        %1419 = vst [vmem:[%s242] sm:$0xff] %v1411
        %1420 = vst [vmem:[%s242 + $0x8] sm:$0xff] %v1412
        %1421 = vst [vmem:[%s242 + $0x10] sm:$0xff] %v1413
        %1422 = vst [vmem:[%s242 + $0x18] sm:$0xff] %v1414
        %1423 = vst [vmem:[%s242 + $0x20] sm:$0xff] %v1415
        %1424 = vst [vmem:[%s242 + $0x28] sm:$0xff] %v1416
        %1425 = vst [vmem:[%s242 + $0x30] sm:$0xff] %v1417
        %1426 = vst [vmem:[%s242 + $0x38] sm:$0xff] %v1418
        %s1427 = sand.u32 %s140, 1
        %s1428 = scalar_lea.sflag [#allocation4], %s1427
        %s1429 = sand.u32 %s140, 1
        %s1430 = smul.addr %s1429, 64
        %s1431 = scalar_lea.vmem [#allocation5], %s1430
        // Predicated region
        $region45: #{tpu_custom_call.1} parent=39 // pred_check
          %p1432 = pneg %p150
        $region46: #{tpu_custom_call.1} parent=39 // pred_check_branch
          %1434 = sbr.rel (%p1432) target = $region48
        $region47: #{tpu_custom_call.1} parent=39 // pred_region
          %s1436 = ssub.s32 1024, 1024
          %1437 = vsyncadd %s1428, %s1436
          %s1438 = smul.addr %s22, 8
          %s1439 = smul.addr %s1438, 128
          %s1440 = scalar_lea.hbm %s5, %s1439
          %s1441 = sshll.u32 %s1431, 4
          %s1442 = int_to_ptr.vmem [resolvable:$true] %s1441
          %1447 = dma.vmem_to_hbm [thread:$0]  %s1442, 1024, %s1440, %s1428, 256, 256, 16
        $region48: #{tpu_custom_call.1} parent=39 // pred_fallthru
          _
      $region40: #{tpu_custom_call.1} parent=5 // pred_fallthru
        _
      %p1448 = scmp.le.s32.totalorder 2, %s17
      // Predicated region
      $region49: #{tpu_custom_call.1} parent=5 // pred_check
        %p1449 = pneg %p1448
      $region50: #{tpu_custom_call.1} parent=5 // pred_check_branch
        %1451 = sbr.rel (%p1449) target = $region52
      $region51: #{tpu_custom_call.1} parent=5 // pred_region
        %s1452 = ssub.s32 %s17, 2
        // Predicated region
        $region53: #{tpu_custom_call.1} parent=51 // pred_check
          %p1453 = pneg %p156
        $region54: #{tpu_custom_call.1} parent=51 // pred_check_branch
          %1455 = sbr.rel (%p1453) target = $region56
        $region55: #{tpu_custom_call.1} parent=51 // pred_region
          %s1456 = sand.u32 %s141, 1
          %s1457 = scalar_lea.sflag [#allocation4], %s1456
          %s1458 = sand.u32 %s141, 1
          %s1459 = smul.addr %s1458, 64
          %s1460 = scalar_lea.vmem [#allocation5], %s1459
          %1461 = dma.done %s1457, 1024
        $region56: #{tpu_custom_call.1} parent=51 // pred_fallthru
          _
      $region52: #{tpu_custom_call.1} parent=5 // pred_fallthru
        _
    $region6: #{tpu_custom_call.1} parent=1 // loop_footer
      %s21 = sadd.s32 1, %s17
    $region7: #{tpu_custom_call.1} parent=1 // loop_footer_branch
      %16 = sbr.rel target = $region3
    $region8: #{tpu_custom_call.1} parent=1 // loop_exit
      _
    %1462 = vsyncpa [#allocation3], 1
    %s1463 = scalar_lea.sflag [#allocation3], 1
    %1464 = vsyncpa %s1463, 1
    %1465 = vsyncpa [#allocation4], 1
    %s1466 = scalar_lea.sflag [#allocation4], 1
    %1467 = vsyncpa %s1466, 1

</llo_original>
